<compile_context>
chip_gen: v7x
topology: tpu7x:2x2x1
jax: 0.10.0
libtpu: 0.0.40
codegen_flags: <defaults>
</compile_context>

<pallas_src>
import functools

import jax
import jax.numpy as jnp
from jax.experimental import pallas as pl
from jax.experimental.pallas import tpu as pltpu


def _mlp_score_kernel(x_ref, w1_ref, b1_ref, w2_ref, o_ref, acc_ref, *,
                      hidden_size, tile_n, mask_tail_cols):
    # x_ref:   [tm, H]  f32   row tile of tokens (cast to bf16 in-kernel)
    # w1_ref:  [H, tn]  bf16  column slice of the first-layer weight
    # b1_ref:  [1, tn]  f32
    # w2_ref:  [8, tn]  f32   row 0 = real H->1 projection, rows 1..7 zero
    # o_ref:   [1, tm]  f32   lane-dense scores row (written at last n step)
    # acc_ref: [8, tm]  f32   partial-sum accumulator across the n grid axis
    n = pl.program_id(1)

    @pl.when(n == 0)
    def _init():
        acc_ref[...] = jnp.zeros_like(acc_ref)

    # In-kernel bf16 cast: avoids a separate wrapper-side XLA convert pass
    # (extra HBM read+write of x); the matmul still accumulates in f32.
    x = x_ref[...].astype(jnp.bfloat16)
    h = jnp.dot(x, w1_ref[...], preferred_element_type=jnp.float32)
    h = jnp.maximum(h + b1_ref[...], 0.0)          # bias + ReLU in f32

    if mask_tail_cols:
        # The last n tile may read past H in W1/b1 (unspecified data): zero
        # those h columns so they cannot contaminate the partial sums below.
        col = n * tile_n + jax.lax.broadcasted_iota(jnp.int32, h.shape, 1)
        h = jnp.where(col < hidden_size, h, 0.0)

    # H->1 projection as an NT matmul (contract this tile's tn columns on both
    # operands): partial sums over n compose exactly and the result is already
    # lane-dense [8, tm] (no transposes, no masked column stores).
    acc_ref[...] += jax.lax.dot_general(
        w2_ref[...], h,
        dimension_numbers=(((1,), (1,)), ((), ())),
        preferred_element_type=jnp.float32)

    @pl.when(n == pl.num_programs(1) - 1)
    def _store():
        o_ref[...] = acc_ref[0:1, :].astype(o_ref.dtype)


def _default_vmem_limit_bytes():
    """Per-generation scoped-VMEM limit (~3/4 of physical VMEM)."""
    try:
        cap = pltpu.get_tpu_info().vmem_capacity_bytes
    except Exception:
        cap = 64 << 20          # conservative fallback (v7x-sized)
    return (cap * 3) // 4       # v7x: 48 MiB; v5e/v6e: 96 MiB


def _pick_tiles(M, H, vmem_limit_bytes):
    """Pick (tm, tn): prefer a resident W1 (tn == H); fall back to N-tiling
    W1 when the resident double-buffered footprint exceeds the VMEM budget
    (large H, notably on v7x's 64 MiB VMEM)."""
    budget = (vmem_limit_bytes * 4) // 5   # headroom for Mosaic internal scratch

    def fits(tm, tn):
        x_bufs = 2 * tm * H * 4            # f32 x tile, double buffered
        w1_bufs = 2 * H * tn * 2           # bf16 W1 slice, double buffered
        h_tmp = tm * tn * 4                # first-layer activation tile
        small = 8 * tm * 4 + 2 * (9 * tn + tm) * 4   # acc + b1/w2/out blocks
        return x_bufs + w1_bufs + h_tmp + small <= budget

    tm = 512 if H <= 2048 else 256         # bigger row tiles when mem-bound
    tm = min(tm, M)
    for tn in (H, 512, 256, 128):          # resident first, then N-tiled W1
        tn = min(tn, H)
        if fits(tm, tn):
            return tm, tn
    while tm > 128 and not fits(tm, min(128, H)):
        tm //= 2                           # very large H: shrink the row tile too
    return tm, min(128, H)


def importance_scores_pallas(x2d, w1, b1, w2, *, tm=None, tn=None,
                             vmem_limit_bytes=None):
    """x2d: [M, H] f32 -> scores [M] f32 via a Pallas MLP kernel."""
    M, H = x2d.shape
    if vmem_limit_bytes is None:
        vmem_limit_bytes = _default_vmem_limit_bytes()
    auto_tm, auto_tn = _pick_tiles(M, H, vmem_limit_bytes)
    tm = auto_tm if tm is None else min(tm, M)
    tn = auto_tn if tn is None else min(tn, H)

    n_m = pl.cdiv(M, tm)
    n_n = pl.cdiv(H, tn)
    mask_tail_cols = (H % tn) != 0

    # W1 lives in VMEM in bf16 (halves the weight footprint); x stays f32 in
    # HBM and is cast in-kernel.
    w1_bf16 = w1.astype(jnp.bfloat16)
    b1_2d = b1.reshape(1, H).astype(jnp.float32)
    # H->1 projection padded to 8 MXU rows (rows 1..7 zero) and to the n-tile
    # grid extent with exact zeros, so partial-tile tails never contribute.
    # (This is an 8 x H weight-sized pad, negligible vs. the activation pass.)
    w2_pad = jnp.zeros((8, n_n * tn), jnp.float32)
    w2_pad = w2_pad.at[0, :H].set(w2.reshape(-1).astype(jnp.float32))

    kernel = functools.partial(
        _mlp_score_kernel, hidden_size=H, tile_n=tn,
        mask_tail_cols=mask_tail_cols)

    # NOTE: the constant-index blocks (b1, w2 -- and W1 when n_n == 1) could be
    # single-buffered via pipeline_mode=pl.Buffered(1); _pick_tiles already
    # budgets for the default double buffer, so we keep the default here.
    out = pl.pallas_call(
        kernel,
        out_shape=jax.ShapeDtypeStruct((1, M), jnp.float32),
        grid_spec=pltpu.PrefetchScalarGridSpec(
            num_scalar_prefetch=0,
            grid=(n_m, n_n),                              # reduction axis last
            in_specs=[
                pl.BlockSpec((tm, H), lambda i, n: (i, 0)),   # x row tile (f32)
                pl.BlockSpec((H, tn), lambda i, n: (0, n)),   # W1 slice (bf16)
                pl.BlockSpec((1, tn), lambda i, n: (0, n)),   # b1 slice (f32)
                pl.BlockSpec((8, tn), lambda i, n: (0, n)),   # padded W2 (f32)
            ],
            out_specs=pl.BlockSpec((1, tm), lambda i, n: (0, i)),
            scratch_shapes=[pltpu.VMEM((8, tm), jnp.float32)],
        ),
        compiler_params=pltpu.CompilerParams(
            dimension_semantics=("parallel", "arbitrary"),
            vmem_limit_bytes=int(vmem_limit_bytes),
        ),
    )(x2d, w1_bf16, b1_2d, w2_pad)
    return out[0]                                          # [M] f32


def token_selection_forward(x, attention_scores, params, top_k):
    """x: [B, T, H]; attention_scores is unused (matches the PyTorch module)."""
    del attention_scores  # unused in the reference forward
    B, T, H = x.shape
    w1, b1, w2, b2 = params
    del b2  # constant shift; cannot change top-k ordering -> dropped (exact)

    # Hot path: importance-score MLP in Pallas.
    x2d = x.reshape(B * T, H)
    scores = importance_scores_pallas(x2d, w1, b1, w2).reshape(B, T)

    num_blocks = int(T * top_k)
    # TODO(synk): top-k (a sort) has no clean Pallas TPU equivalent; done in JAX.
    _, selected_indices = jax.lax.top_k(scores, num_blocks)       # [B, K]

    # TODO(synk): when K*H is large, replace this XLA gather with a
    # PrefetchScalarGridSpec(num_scalar_prefetch=1) + pl.Element(1) row-gather
    # kernel; negligible at these sizes.
    selected_tokens = jnp.take_along_axis(
        x, selected_indices[:, :, None], axis=1)                  # [B, K, H]
    return selected_tokens, selected_indices


def init_params(key, hidden_size):
    """Deterministic init matching nn.Linear(H,H) and nn.Linear(H,1) shapes."""
    k1, k2, k3, k4 = jax.random.split(key, 4)
    w1 = jax.random.normal(k1, (hidden_size, hidden_size), jnp.float32) * 0.05
    b1 = jax.random.normal(k2, (hidden_size,), jnp.float32) * 0.05
    w2 = jax.random.normal(k3, (hidden_size, 1), jnp.float32) * 0.05
    b2 = jax.random.normal(k4, (1,), jnp.float32) * 0.05
    return (w1, b1, w2, b2)


if __name__ == "__main__":
    B, T, H = 2, 8, 32
    NUM_HEADS = 4
    TOP_K = 0.5  # -> int(T * 0.5) = 4 selected tokens per batch element

    key = jax.random.PRNGKey(0)
    kx, ka, kp = jax.random.split(key, 3)
    x = jax.random.normal(kx, (B, T, H), jnp.float32)
    attention_scores = jax.random.normal(ka, (B, NUM_HEADS, T, T), jnp.float32)
    params = init_params(kp, H)

    fwd = jax.jit(functools.partial(token_selection_forward, top_k=TOP_K))
    selected_tokens, selected_indices = fwd(x, attention_scores, params)
    jax.block_until_ready((selected_tokens, selected_indices))

    # Reference does the SAME math as the kernel (bf16 inputs to the first
    # matmul, f32 accumulation; b2 dropped since a constant shift cannot change
    # the ordering), so index equality is a fair kernel-vs-JAX check. Note this
    # is parity with the kernel's numerics, not with an all-f32 torch run
    # (near-ties could, in principle, resolve differently there).
    w1, b1, w2, b2 = params
    h_ref = jnp.maximum(
        jnp.dot(x.astype(jnp.bfloat16), w1.astype(jnp.bfloat16),
                preferred_element_type=jnp.float32) + b1, 0.0)
    ref_scores = jnp.dot(h_ref, w2)[..., 0]
    K = int(T * TOP_K)
    _, ref_idx = jax.lax.top_k(ref_scores, K)
    ref_tokens = jnp.take_along_axis(x, ref_idx[:, :, None], axis=1)

    assert selected_tokens.shape == (B, K, H)
    assert selected_indices.shape == (B, K)
    assert jnp.array_equal(ref_idx, selected_indices)
    assert jnp.allclose(ref_tokens, selected_tokens, atol=1e-5, rtol=1e-5)

    print("KERNEL_OK")
</pallas_src>

<mosaic_0001>
module attributes {stable_mosaic.version = 11 : i64} {
  func.func @_mlp_score_kernel(%arg0: i32, %arg1: i32, %arg2: memref<16x32xf32, #tpu.memory_space<vmem>>, %arg3: memref<32x32xbf16, #tpu.memory_space<vmem>>, %arg4: memref<1x32xf32, #tpu.memory_space<vmem>>, %arg5: memref<8x32xf32, #tpu.memory_space<vmem>>, %arg6: memref<1x16xf32, #tpu.memory_space<vmem>>, %arg7: memref<8x16xf32, #tpu.memory_space<vmem>>) attributes {dimension_semantics = [#tpu.dimension_semantics<parallel>, #tpu.dimension_semantics<arbitrary>], iteration_bounds = array<i64: 1, 1>, scalar_prefetch = 0 : i64, scratch_operands = 1 : i64, tpu.core_type = #tpu.core_type<tc>, window_params = [{transform_indices = @transform_0, window_bounds = array<i64: 16, 32>}, {transform_indices = @transform_1, window_bounds = array<i64: 32, 32>}, {transform_indices = @transform_2, window_bounds = array<i64: 1, 32>}, {transform_indices = @transform_3, window_bounds = array<i64: 8, 32>}, {transform_indices = @transform_4, window_bounds = array<i64: 1, 16>}]} {
    %c0_i32 = arith.constant 0 : i32
    %0 = arith.cmpi eq, %arg1, %c0_i32 : i32
    %1 = arith.extui %0 : i1 to i32
    %c0_i32_0 = arith.constant 0 : i32
    %2 = arith.cmpi ne, %1, %c0_i32_0 : i32
    scf.if %2 {
      %cst_16 = arith.constant 0.000000e+00 : f32
      %20 = vector.broadcast %cst_16 : f32 to vector<8x16xf32>
      %c0_17 = arith.constant 0 : index
      %c0_18 = arith.constant 0 : index
      %21 = vector.load %arg7[%c0_17, %c0_18] : memref<8x16xf32, #tpu.memory_space<vmem>>, vector<8x16xf32>
      tpu.vector_store %arg7[%c0_17, %c0_18], %20 {strides = array<i32>} : memref<8x16xf32, #tpu.memory_space<vmem>>, vector<8x16xf32>,
    } else {
    }
    %c0 = arith.constant 0 : index
    %c0_1 = arith.constant 0 : index
    %3 = vector.load %arg2[%c0, %c0_1] : memref<16x32xf32, #tpu.memory_space<vmem>>, vector<16x32xf32>
    %4 = arith.truncf %3 : vector<16x32xf32> to vector<16x32xbf16>
    %c0_2 = arith.constant 0 : index
    %c0_3 = arith.constant 0 : index
    %5 = vector.load %arg3[%c0_2, %c0_3] : memref<32x32xbf16, #tpu.memory_space<vmem>>, vector<32x32xbf16>
    %cst = arith.constant dense<0.000000e+00> : vector<16x32xf32>
    %6 = tpu.matmul %4, %5, %cst {dimension_numbers = #tpu.dot_dimension_numbers<[1], [0], [0], [1], [0, 0, 1, 1], [], []>} : vector<16x32xbf16>, vector<32x32xbf16>, vector<16x32xf32> -> vector<16x32xf32>
    %c0_4 = arith.constant 0 : index
    %c0_5 = arith.constant 0 : index
    %7 = vector.load %arg4[%c0_4, %c0_5] : memref<1x32xf32, #tpu.memory_space<vmem>>, vector<1x32xf32>
    %8 = vector.broadcast %7 : vector<1x32xf32> to vector<16x32xf32>
    %9 = arith.addf %6, %8 : vector<16x32xf32>
    %cst_6 = arith.constant 0.000000e+00 : f32
    %10 = vector.broadcast %cst_6 : f32 to vector<16x32xf32>
    %11 = arith.maximumf %9, %10 : vector<16x32xf32>
    %c0_7 = arith.constant 0 : index
    %c0_8 = arith.constant 0 : index
    %12 = vector.load %arg7[%c0_7, %c0_8] : memref<8x16xf32, #tpu.memory_space<vmem>>, vector<8x16xf32>
    %c0_9 = arith.constant 0 : index
    %c0_10 = arith.constant 0 : index
    %13 = vector.load %arg5[%c0_9, %c0_10] : memref<8x32xf32, #tpu.memory_space<vmem>>, vector<8x32xf32>
    %cst_11 = arith.constant dense<0.000000e+00> : vector<8x16xf32>
    %14 = tpu.matmul %13, %11, %cst_11 {dimension_numbers = #tpu.dot_dimension_numbers<[1], [1], [0], [0], [0, 0, 1, 0], [], []>} : vector<8x32xf32>, vector<16x32xf32>, vector<8x16xf32> -> vector<8x16xf32>
    %15 = arith.addf %12, %14 : vector<8x16xf32>
    %c0_12 = arith.constant 0 : index
    %c0_13 = arith.constant 0 : index
    %16 = vector.load %arg7[%c0_12, %c0_13] : memref<8x16xf32, #tpu.memory_space<vmem>>, vector<8x16xf32>
    tpu.vector_store %arg7[%c0_12, %c0_13], %15 {strides = array<i32>} : memref<8x16xf32, #tpu.memory_space<vmem>>, vector<8x16xf32>,
    %c0_i32_14 = arith.constant 0 : i32
    %17 = arith.cmpi eq, %arg1, %c0_i32_14 : i32
    %18 = arith.extui %17 : i1 to i32
    %c0_i32_15 = arith.constant 0 : i32
    %19 = arith.cmpi ne, %18, %c0_i32_15 : i32
    scf.if %19 {
      %c0_16 = arith.constant 0 : index
      %c0_17 = arith.constant 0 : index
      %20 = vector.load %arg7[%c0_16, %c0_17] : memref<8x16xf32, #tpu.memory_space<vmem>>, vector<1x16xf32>
      %c0_18 = arith.constant 0 : index
      %c0_19 = arith.constant 0 : index
      %21 = vector.load %arg6[%c0_18, %c0_19] : memref<1x16xf32, #tpu.memory_space<vmem>>, vector<1x16xf32>
      tpu.vector_store %arg6[%c0_18, %c0_19], %20 {strides = array<i32>} : memref<1x16xf32, #tpu.memory_space<vmem>>, vector<1x16xf32>,
    } else {
    }
    return
  }
  func.func @transform_0(%arg0: i32, %arg1: i32) -> (i32, i32) {
    %c0_i32 = arith.constant 0 : i32
    %c0_i32_0 = arith.constant 0 : i32
    return %arg0, %c0_i32 : i32, i32
  }
  func.func @transform_1(%arg0: i32, %arg1: i32) -> (i32, i32) {
    %c0_i32 = arith.constant 0 : i32
    %c0_i32_0 = arith.constant 0 : i32
    return %c0_i32, %arg1 : i32, i32
  }
  func.func @transform_2(%arg0: i32, %arg1: i32) -> (i32, i32) {
    %c0_i32 = arith.constant 0 : i32
    %c0_i32_0 = arith.constant 0 : i32
    return %c0_i32, %arg1 : i32, i32
  }
  func.func @transform_3(%arg0: i32, %arg1: i32) -> (i32, i32) {
    %c0_i32 = arith.constant 0 : i32
    %c0_i32_0 = arith.constant 0 : i32
    return %c0_i32, %arg1 : i32, i32
  }
  func.func @transform_4(%arg0: i32, %arg1: i32) -> (i32, i32) {
    %c0_i32 = arith.constant 0 : i32
    %c0_i32_0 = arith.constant 0 : i32
    return %c0_i32, %arg0 : i32, i32
  }
}

</mosaic_0001>

<llo_original>
// kernel: squeeze.1
$region0: #{squeeze.1}
  %s0 = inlined_call_operand.vmem [shape: f32[16], index: 0, kind: input, shape index: {}]
  %s1 = inlined_call_operand.vmem [shape: f32[2,8], index: 1, kind: output, shape index: {}]
  $region1: #{squeeze.1} parent=0
    #allocation0 [shape = 'u8[4096]{0}', space=vmem, size = 0x1000, scoped, tag = 'scoped mem for output reshape']
    #allocation1 [shape = 'u8[4096]{0}', space=vmem, size = 0x1000, scoped, tag = 'scoped mem for input reshape']
    %s3 = sshllo.u32 0, 1
    %v4 = vld [vmem:[%s0] sm:%s3]
    %5 = vst [vmem:[#allocation1] sm:%s3] %v4
    %v6 = vld [vmem:[#allocation1] sm:$0x1]
    %vm7 = vcmask 64512
    %8 = vst.msk [vmem:[#allocation0] sm:$0x1] %vm7, %v6
    %v9 = vld [vmem:[#allocation1] sm:$0x1]
    %10 = vrot.lane.b32.xlu0 %v9, 120
    %v11 = vpop.permute.xlu0 %10
    %vm12 = vcmask 64512
    %s13 = scalar_lea.vmem [#allocation0], 1
    %14 = vst.msk [vmem:[%s13] sm:$0x1] %vm12, %v11
    %s16 = sshllo.u32 0, 2
    %v18 = vld [vmem:[#allocation0] sm:%s16]
    %s19 = sshllo.u32 0, 2
    %20 = vst [vmem:[%s1] sm:%s19] %v18

// kernel: token_selection_forward.1
$region0: #{token_selection_forward.1}
  #allocation0 [shape = 'u32[]', space=smem, size = 0x4, offset = 0x4, fixed_abs, tag = 'smem constant byte address 0x4 - core index']
  #allocation1 [shape = 'u32[144,128]{1,0:T(1,128)}', space=vmem, size = 0x12000, scoped, tag = 'internal scratch']
  #allocation2 [shape = 'f32[8,16]{1,0:T(8,128)}', space=vmem, size = 0x1000, scoped, tag = 'scratch operand']
  %s0 = inlined_call_operand.vmem [shape: f32[16,32], index: 0, kind: input, shape index: {}]
  %s1 = inlined_call_operand.vmem [shape: bf16[32,32], index: 1, kind: input, shape index: {}]
  %s2 = inlined_call_operand.vmem [shape: f32[1,32], index: 2, kind: input, shape index: {}]
  %s3 = inlined_call_operand.vmem [shape: f32[8,32], index: 3, kind: input, shape index: {}]
  %s4 = inlined_call_operand.vmem [shape: f32[1,16], index: 4, kind: output, shape index: {}]
  %s5 = sld [smem:[#allocation0]]
  $region34: #{token_selection_forward.1} parent=0
    _
  %s7 = ssub.s32 1, %s5
  %s8 = scalar_select 0, %s7, %s5
  // Predicated region
  $region2: #{token_selection_forward.1} parent=0 // pred_check
    _
  $region3: #{token_selection_forward.1} parent=0 // pred_check_branch
    %10 = sbr.rel (0) target = $region5
  $region4: #{token_selection_forward.1} parent=0 // pred_region
    _
  $region5: #{token_selection_forward.1} parent=0 // pred_fallthru
    _
  // Predicated region
  $region6: #{token_selection_forward.1} parent=0 // pred_check
    _
  $region7: #{token_selection_forward.1} parent=0 // pred_check_branch
    %12 = sbr.rel (0) target = $region9
  $region8: #{token_selection_forward.1} parent=0 // pred_region
    _
  $region9: #{token_selection_forward.1} parent=0 // pred_fallthru
    _
  // Predicated region
  $region10: #{token_selection_forward.1} parent=0 // pred_check
    _
  $region11: #{token_selection_forward.1} parent=0 // pred_check_branch
    %14 = sbr.rel (0) target = $region13
  $region12: #{token_selection_forward.1} parent=0 // pred_region
    _
  $region13: #{token_selection_forward.1} parent=0 // pred_fallthru
    _
  // Predicated region
  $region14: #{token_selection_forward.1} parent=0 // pred_check
    _
  $region15: #{token_selection_forward.1} parent=0 // pred_check_branch
    %16 = sbr.rel (0) target = $region17
  $region16: #{token_selection_forward.1} parent=0 // pred_region
    _
  $region17: #{token_selection_forward.1} parent=0 // pred_fallthru
    _
  %p18 = scmp.eq.s32.totalorder 0, 0
  // Predicated region
  $region18: #{token_selection_forward.1} parent=0 // pred_check
    %p19 = pneg %p18
  $region19: #{token_selection_forward.1} parent=0 // pred_check_branch
    %21 = sbr.rel (%p19) target = $region21
  $region20: #{token_selection_forward.1} parent=0 // pred_region
    %vm22 = vcmask 130048
    %23 = vst.msk [vmem:[#allocation2] sm:$0xff] %vm22, 0.0
  $region21: #{token_selection_forward.1} parent=0 // pred_fallthru
    _
  %v24 = vld [vmem:[%s0] sm:$0xff]
  %v25 = vld [vmem:[%s0 + $0x8] sm:$0xff]
  %v26 = vpack.c.bf16 %v25, %v24
  %v27 = vld [vmem:[%s1] sm:$0xf]
  %v28 = vld [vmem:[%s1 + $0x4] sm:$0xf]
  %v29 = vld [vmem:[%s1 + $0x8] sm:$0xf]
  %v30 = vld [vmem:[%s1 + $0xc] sm:$0xf]
  %v31 = vld [vmem:[%s2] sm:$0x1]
  %v33 = vlaneseq
  %v34 = vshrl.u32 %v33, 7
  %v35 = vsub.s32 0, %v34
  %v36 = vrot.slane %v31, %v35
  %v42 = vunpack.c.l.b16 %v27
  %v43 = vunpack.c.l.b16 %v28
  %v44 = vunpack.c.l.b16 %v29
  %v45 = vunpack.c.l.b16 %v30
  %v46 = vpack.c.b16 %v43, %v42
  %v47 = vpack.c.b16 %v45, %v44
  %vm50 = vcmask 261120
  %v52 = vsel %vm50, %v26, 0
  %54 = vmatprep.subr.bf16.mxu0 0
  %55 = vmatpush1.bf16.msra.mxu0 %v46
  %56 = vmatprep.subr.bf16.mxu0 0
  %57 = vmatpush1.bf16.msra.mxu0 %v47
  %58 = vmatprep.subr.bf16.mxu0 0
  %59 = vmatpush1.bf16.msra.mxu0 0
  %60 = vmatprep.subr.bf16.mxu0 0
  %61 = vmatpush1.bf16.msra.mxu0 0
  %62 = vmatprep.subr.bf16.mxu0 0
  %63 = vmatpush1.bf16.msra.mxu0 0
  %64 = vmatprep.subr.bf16.mxu0 0
  %65 = vmatpush1.bf16.msra.mxu0 0
  %66 = vmatprep.subr.bf16.mxu0 0
  %67 = vmatpush1.bf16.msra.mxu0 0
  %68 = vmatprep.subr.bf16.mxu0 0
  %69 = vmatpush1.bf16.msra.mxu0 0
  %70 = vmatprep.subr.bf16.mxu0 0
  %71 = vmatpush1.bf16.msra.mxu0 0
  %72 = vmatprep.subr.bf16.mxu0 0
  %73 = vmatpush1.bf16.msra.mxu0 0
  %74 = vmatprep.subr.bf16.mxu0 0
  %75 = vmatpush1.bf16.msra.mxu0 0
  %76 = vmatprep.subr.bf16.mxu0 0
  %77 = vmatpush1.bf16.msra.mxu0 0
  %78 = vmatprep.subr.bf16.mxu0 0
  %79 = vmatpush1.bf16.msra.mxu0 0
  %80 = vmatprep.subr.bf16.mxu0 0
  %81 = vmatpush1.bf16.msra.mxu0 0
  %82 = vmatprep.subr.bf16.mxu0 0
  %83 = vmatpush1.bf16.msra.mxu0 0
  %84 = vmatprep.subr.bf16.mxu0 0
  %85 = vmatpush1.bf16.msra.mxu0 0
  %86 = vmatprep.mubr.bf16.mxu0 0
  %87 = vmatmul.mubr.bf16.gmra.mrb[0].mxu0 %v52
  %v88 = vpop.f32.mrb[0].mxu0
  %v89 = vadd.f32 %v36, %v88
  %v90 = vpop.f32.mrb[0].mxu0
  %v91 = vpop.f32.mrb[0].mxu0
  %v92 = vadd.f32 %v36, %v91
  %v93 = vpop.f32.mrb[0].mxu0
  %94 = vdwg.mxu0
  %v95 = vmax.f32 %v89, 0.0
  %v96 = vmax.f32 %v92, 0.0
  %v97 = vld [vmem:[#allocation2] sm:$0xff]
  %v98 = vld [vmem:[%s3] sm:$0xff]
  %v100 = vsel %vm50, %v98, 0
  %v103 = vsel %vm50, %v95, 0
  %v106 = vsel %vm50, %v96, 0
  %108 = vmatprep.subr.mxu0 0.0
  %109 = vmatpush1.xpose.msra.mxu0 %v103
  %110 = vmatprep.subr.mxu0 0.0
  %111 = vmatpush1.xpose.msra.mxu0 %v106
  %112 = vmatprep.subr.mxu0 0.0
  %113 = vmatpush1.xpose.msra.mxu0 0.0
  %114 = vmatprep.subr.mxu0 0.0
  %115 = vmatpush1.xpose.msra.mxu0 0.0
  %116 = vmatprep.subr.mxu0 0.0
  %117 = vmatpush1.xpose.msra.mxu0 0.0
  %118 = vmatprep.subr.mxu0 0.0
  %119 = vmatpush1.xpose.msra.mxu0 0.0
  %120 = vmatprep.subr.mxu0 0.0
  %121 = vmatpush1.xpose.msra.mxu0 0.0
  %122 = vmatprep.subr.mxu0 0.0
  %123 = vmatpush1.xpose.msra.mxu0 0.0
  %124 = vmatprep.subr.mxu0 0.0
  %125 = vmatpush1.xpose.msra.mxu0 0.0
  %126 = vmatprep.subr.mxu0 0.0
  %127 = vmatpush1.xpose.msra.mxu0 0.0
  %128 = vmatprep.subr.mxu0 0.0
  %129 = vmatpush1.xpose.msra.mxu0 0.0
  %130 = vmatprep.subr.mxu0 0.0
  %131 = vmatpush1.xpose.msra.mxu0 0.0
  %132 = vmatprep.subr.mxu0 0.0
  %133 = vmatpush1.xpose.msra.mxu0 0.0
  %134 = vmatprep.subr.mxu0 0.0
  %135 = vmatpush1.xpose.msra.mxu0 0.0
  %136 = vmatprep.subr.mxu0 0.0
  %137 = vmatpush1.xpose.msra.mxu0 0.0
  %138 = vmatprep.subr.mxu0 0.0
  %139 = vmatpush1.xpose.msra.mxu0 0.0
  %140 = vmatprep.subr.mxu0 0.0
  %141 = vmatpush1.xpose.msra.mxu0 0.0
  %142 = vmatprep.subr.mxu0 0.0
  %143 = vmatpush1.xpose.msra.mxu0 0.0
  %144 = vmatprep.subr.mxu0 0.0
  %145 = vmatpush1.xpose.msra.mxu0 0.0
  %146 = vmatprep.subr.mxu0 0.0
  %147 = vmatpush1.xpose.msra.mxu0 0.0
  %148 = vmatprep.subr.mxu0 0.0
  %149 = vmatpush1.xpose.msra.mxu0 0.0
  %150 = vmatprep.subr.mxu0 0.0
  %151 = vmatpush1.xpose.msra.mxu0 0.0
  %152 = vmatprep.subr.mxu0 0.0
  %153 = vmatpush1.xpose.msra.mxu0 0.0
  %154 = vmatprep.subr.mxu0 0.0
  %155 = vmatpush1.xpose.msra.mxu0 0.0
  %156 = vmatprep.subr.mxu0 0.0
  %157 = vmatpush1.xpose.msra.mxu0 0.0
  %158 = vmatprep.subr.mxu0 0.0
  %159 = vmatpush1.xpose.msra.mxu0 0.0
  %160 = vmatprep.subr.mxu0 0.0
  %161 = vmatpush1.xpose.msra.mxu0 0.0
  %162 = vmatprep.subr.mxu0 0.0
  %163 = vmatpush1.xpose.msra.mxu0 0.0
  %164 = vmatprep.subr.mxu0 0.0
  %165 = vmatpush1.xpose.msra.mxu0 0.0
  %166 = vmatprep.subr.mxu0 0.0
  %167 = vmatpush1.xpose.msra.mxu0 0.0
  %168 = vmatprep.subr.mxu0 0.0
  %169 = vmatpush1.xpose.msra.mxu0 0.0
  %170 = vmatprep.subr.mxu0 0.0
  %171 = vmatpush1.xpose.msra.mxu0 0.0
  %172 = vmatprep.mubr.f32.mxu0 0.0
  %173 = vmatmul.mubr.f32.gmra.mrb[0].mxu0 %v100
  %v174 = vpop.f32.mrb[0].mxu0
  %v175 = vadd.f32 0.0, %v174
  %v176 = vpop.f32.mrb[0].mxu0
  %177 = vdwg.mxu0
  %v178 = vadd.f32 %v97, %v175
  %vm179 = vcmask 130048
  %180 = vst.msk [vmem:[#allocation2] sm:$0xff] %vm179, %v178
  // Predicated region
  $region22: #{token_selection_forward.1} parent=0 // pred_check
    %p181 = pneg %p18
  $region23: #{token_selection_forward.1} parent=0 // pred_check_branch
    %183 = sbr.rel (%p181) target = $region25
  $region24: #{token_selection_forward.1} parent=0 // pred_region
    %v184 = vld [vmem:[#allocation2] sm:$0x1]
    %vm185 = vcmask 122880
    %186 = vst.msk [vmem:[%s4] sm:$0x1] %vm185, %v184
  $region25: #{token_selection_forward.1} parent=0 // pred_fallthru
    _
  // Predicated region
  $region26: #{token_selection_forward.1} parent=0 // pred_check
    _
  $region27: #{token_selection_forward.1} parent=0 // pred_check_branch
    %188 = sbr.rel (0) target = $region29
  $region28: #{token_selection_forward.1} parent=0 // pred_region
    _
  $region29: #{token_selection_forward.1} parent=0 // pred_fallthru
    _
  // Predicated region
  $region30: #{token_selection_forward.1} parent=0 // pred_check
    _
  $region31: #{token_selection_forward.1} parent=0 // pred_check_branch
    %190 = sbr.rel (0) target = $region33
  $region32: #{token_selection_forward.1} parent=0 // pred_region
    _
  $region33: #{token_selection_forward.1} parent=0 // pred_fallthru
    _

</llo_original>
